<compile_context>
chip_gen: v7x
topology: tpu7x:2x2x1
jax: 0.10.0
libtpu: 0.0.40
codegen_flags: <defaults>
</compile_context>

<pallas_src>
import functools

import jax
import jax.numpy as jnp
from jax import lax
from jax.experimental import pallas as pl
from jax.experimental.pallas import tpu as pltpu


_VMEM_LIMIT_BYTES = 48 * 1024 * 1024    # safe on v5e/v6e (128 MiB) and v7x (64 MiB)
_MAX_TILE_BYTES = 2 * 1024 * 1024       # per-buffer time-tile target (double-buffered)


# --------------------- tiled fast path (stride == 1, odd K) ---------------------

def _moving_avg_tiled_kernel(front_ref, x_ref, back_ref, o_ref, *,
                             kernel_size, pad, tl, hp):
    """One (batch, time-tile) block. x block (1, tl, C); halo blocks (1, hp, C)."""
    i = pl.program_id(1)
    last = pl.num_programs(1) - 1
    x = x_ref[0]                                        # (tl, C), input dtype
    c = x.shape[-1]

    if pad > 0:
        # Edge replication == index clamping: the first/last time tile replicate
        # their own first/last row; interior tiles use the true halo rows.
        edge_front = jnp.broadcast_to(x[0:1, :], (pad, c))
        edge_back = jnp.broadcast_to(x[tl - 1:tl, :], (pad, c))
        halo_front = front_ref[0, hp - pad:hp, :]       # last `pad` rows of prev block
        halo_back = back_ref[0, 0:pad, :]               # first `pad` rows of next block
        front = jnp.where(i == 0, edge_front, halo_front)
        back = jnp.where(i == last, edge_back, halo_back)
        window = jnp.concatenate([front, x, back], axis=0)   # (tl + 2*pad, C)
    else:
        window = x

    acc = jnp.zeros((tl, c), jnp.float32)
    for k in range(kernel_size):                        # unrolled sliding-window sum
        acc = acc + lax.slice(window, (k, 0), (k + tl, c)).astype(jnp.float32)
    o_ref[0] = (acc * (1.0 / kernel_size)).astype(o_ref.dtype)


def _choose_time_tile(l, c, itemsize, pad):
    """Pick (time_tile, halo): both multiples of 16, halo | tile, tile | L."""
    hp = 16
    while hp < pad:
        hp *= 2
    best = None
    for tl in (512, 1024, 256, 2048, 128, 4096, 64, 32, 16):
        if tl < hp or l % tl != 0:
            continue
        if tl * c * itemsize <= _MAX_TILE_BYTES:
            return tl, hp
        if best is None or tl < best:
            best = tl                                   # too big for target: keep smallest
    return best, hp


def _moving_avg_stride1(x, kernel_size):
    b, l, c = x.shape
    pad = (kernel_size - 1) // 2
    tl, hp = _choose_time_tile(l, c, x.dtype.itemsize, pad)
    if tl is None:
        return None                                     # shapes don't tile; use fallback
    nt = l // tl                                        # time tiles (L_out == L here)
    r = tl // hp                                        # halo-granularity blocks per tile
    n_halo = l // hp                                    # total halo-granularity blocks

    kernel = functools.partial(
        _moving_avg_tiled_kernel, kernel_size=kernel_size, pad=pad, tl=tl, hp=hp)

    main_spec = pl.BlockSpec((1, tl, c), lambda bi, ti: (bi, ti, 0))
    front_spec = pl.BlockSpec(
        (1, hp, c), lambda bi, ti: (bi, jnp.maximum(ti * r - 1, 0), 0))
    back_spec = pl.BlockSpec(
        (1, hp, c), lambda bi, ti: (bi, jnp.minimum((ti + 1) * r, n_halo - 1), 0))

    return pl.pallas_call(
        kernel,
        out_shape=jax.ShapeDtypeStruct((b, l, c), x.dtype),
        grid=(b, nt),
        in_specs=[front_spec, main_spec, back_spec],
        out_specs=pl.BlockSpec((1, tl, c), lambda bi, ti: (bi, ti, 0)),
        compiler_params=pltpu.CompilerParams(
            dimension_semantics=("parallel", "parallel"),
            vmem_limit_bytes=_VMEM_LIMIT_BYTES),
    )(x, x, x)                                          # same buffer, three block views


# ------------------- general path (any stride / odd shapes) --------------------

def _moving_avg_full_kernel(x_ref, o_ref, *, kernel_size, stride, pad, l_out):
    x = x_ref[0]                                        # (L, C), input dtype
    l, c = x.shape
    if pad > 0:
        front = jnp.broadcast_to(x[0:1, :], (pad, c))
        back = jnp.broadcast_to(x[l - 1:l, :], (pad, c))
        xp = jnp.concatenate([front, x, back], axis=0)  # VMEM-local only; no HBM pad copy
    else:
        xp = x
    acc = jnp.zeros((l_out, c), jnp.float32)
    for k in range(kernel_size):
        end = k + (l_out - 1) * stride + 1
        acc = acc + lax.slice(xp, (k, 0), (end, c), (stride, 1)).astype(jnp.float32)
    o_ref[0] = (acc * (1.0 / kernel_size)).astype(o_ref.dtype)


def _moving_avg_fallback(x, kernel_size, stride):
    b, l, c = x.shape
    pad = (kernel_size - 1) // 2
    l_out = (l + 2 * pad - kernel_size) // stride + 1
    kernel = functools.partial(
        _moving_avg_full_kernel,
        kernel_size=kernel_size, stride=stride, pad=pad, l_out=l_out)
    return pl.pallas_call(
        kernel,
        out_shape=jax.ShapeDtypeStruct((b, l_out, c), x.dtype),
        grid=(b,),
        in_specs=[pl.BlockSpec((1, l, c), lambda bi: (bi, 0, 0))],
        out_specs=pl.BlockSpec((1, l_out, c), lambda bi: (bi, 0, 0)),
        compiler_params=pltpu.CompilerParams(
            dimension_semantics=("parallel",),
            vmem_limit_bytes=_VMEM_LIMIT_BYTES),
    )(x)


def moving_avg(x, kernel_size, stride):
    """Equivalent of MovingAvg(kernel_size, stride).forward(x), x: (B, L, C)."""
    if stride == 1 and kernel_size % 2 == 1:
        out = _moving_avg_stride1(x, kernel_size)
        if out is not None:
            return out
    # General-stride / non-tileable shapes: one whole sequence per grid step.
    return _moving_avg_fallback(x, kernel_size, stride)


# --------------------------------- reference -----------------------------------

def _moving_avg_ref(x, kernel_size, stride):
    """Pure-JAX reference mirroring the PyTorch forward."""
    pad = (kernel_size - 1) // 2
    front = jnp.repeat(x[:, 0:1, :], pad, axis=1)
    end = jnp.repeat(x[:, -1:, :], pad, axis=1)
    xpad = jnp.concatenate([front, x, end], axis=1)
    l_pad = xpad.shape[1]
    l_out = (l_pad - kernel_size) // stride + 1
    windows = jnp.stack(
        [xpad[:, k: k + (l_out - 1) * stride + 1: stride, :] for k in range(kernel_size)],
        axis=0)
    return jnp.mean(windows, axis=0).astype(x.dtype)


if __name__ == "__main__":
    key = jax.random.PRNGKey(0)
    k1, k2, k3 = jax.random.split(key, 3)

    # 1) Typical decomposition config -> tiled fast path (3 time tiles: exercises
    #    first-tile / interior / last-tile halo handling).
    x1 = jax.random.normal(k1, (2, 96, 128), dtype=jnp.float32)
    o1 = jax.block_until_ready(moving_avg(x1, kernel_size=25, stride=1))
    r1 = _moving_avg_ref(x1, 25, 1)
    assert o1.shape == r1.shape, (o1.shape, r1.shape)
    assert jnp.allclose(o1, r1, atol=1e-5, rtol=1e-5)

    # 2) Small channel count, single time tile -> fast path with both edges replicated.
    x2 = jax.random.normal(k2, (2, 64, 8), dtype=jnp.float32)
    o2 = jax.block_until_ready(moving_avg(x2, kernel_size=7, stride=1))
    r2 = _moving_avg_ref(x2, 7, 1)
    assert o2.shape == r2.shape, (o2.shape, r2.shape)
    assert jnp.allclose(o2, r2, atol=1e-5, rtol=1e-5)

    # 3) Strided pooling -> general fallback path.
    x3 = jax.random.normal(k3, (2, 16, 8), dtype=jnp.float32)
    o3 = jax.block_until_ready(moving_avg(x3, kernel_size=5, stride=2))
    r3 = _moving_avg_ref(x3, 5, 2)
    assert o3.shape == r3.shape, (o3.shape, r3.shape)
    assert jnp.allclose(o3, r3, atol=1e-5, rtol=1e-5)

    print("KERNEL_OK")
</pallas_src>

<mosaic_0001>
module attributes {stable_mosaic.version = 11 : i64} {
  func.func @_moving_avg_tiled_kernel(%arg0: i32, %arg1: i32, %arg2: memref<1x16x128xf32, #tpu.memory_space<vmem>>, %arg3: memref<1x32x128xf32, #tpu.memory_space<vmem>>, %arg4: memref<1x16x128xf32, #tpu.memory_space<vmem>>, %arg5: memref<1x32x128xf32, #tpu.memory_space<vmem>>) attributes {dimension_semantics = [#tpu.dimension_semantics<parallel>, #tpu.dimension_semantics<parallel>], iteration_bounds = array<i64: 2, 3>, scalar_prefetch = 0 : i64, scratch_operands = 0 : i64, tpu.core_type = #tpu.core_type<tc>, window_params = [{transform_indices = @transform_0, window_bounds = array<i64: 1, 16, 128>}, {transform_indices = @transform_1, window_bounds = array<i64: 1, 32, 128>}, {transform_indices = @transform_2, window_bounds = array<i64: 1, 16, 128>}, {transform_indices = @transform_3, window_bounds = array<i64: 1, 32, 128>}]} {
    %c0 = arith.constant 0 : index
    %c0_0 = arith.constant 0 : index
    %c0_1 = arith.constant 0 : index
    %0 = vector.load %arg3[%c0, %c0_0, %c0_1] : memref<1x32x128xf32, #tpu.memory_space<vmem>>, vector<1x32x128xf32>
    %1 = vector.shape_cast %0 : vector<1x32x128xf32> to vector<32x128xf32>
    %2 = vector.extract_strided_slice %1 {offsets = [0, 0], sizes = [1, 128], strides = [1, 1]} : vector<32x128xf32> to vector<1x128xf32>
    %3 = vector.shape_cast %2 : vector<1x128xf32> to vector<1x128xf32>
    %4 = vector.broadcast %3 : vector<1x128xf32> to vector<12x128xf32>
    %5 = vector.extract_strided_slice %1 {offsets = [31, 0], sizes = [1, 128], strides = [1, 1]} : vector<32x128xf32> to vector<1x128xf32>
    %6 = vector.shape_cast %5 : vector<1x128xf32> to vector<1x128xf32>
    %7 = vector.broadcast %6 : vector<1x128xf32> to vector<12x128xf32>
    %c0_2 = arith.constant 0 : index
    %c4 = arith.constant 4 : index
    %c0_3 = arith.constant 0 : index
    %8 = vector.load %arg2[%c0_2, %c4, %c0_3] : memref<1x16x128xf32, #tpu.memory_space<vmem>>, vector<1x12x128xf32>
    %9 = vector.shape_cast %8 : vector<1x12x128xf32> to vector<12x128xf32>
    %c0_4 = arith.constant 0 : index
    %c0_5 = arith.constant 0 : index
    %c0_6 = arith.constant 0 : index
    %10 = vector.load %arg4[%c0_4, %c0_5, %c0_6] : memref<1x16x128xf32, #tpu.memory_space<vmem>>, vector<1x12x128xf32>
    %11 = vector.shape_cast %10 : vector<1x12x128xf32> to vector<12x128xf32>
    %c0_i32 = arith.constant 0 : i32
    %12 = arith.cmpi eq, %arg1, %c0_i32 : i32
    %13 = arith.select %12, %4, %9 : vector<12x128xf32>
    %c2_i32 = arith.constant 2 : i32
    %14 = arith.cmpi eq, %arg1, %c2_i32 : i32
    %15 = arith.select %14, %7, %11 : vector<12x128xf32>
    %16 = tpu.concatenate %13, %1, %15 in 0 : vector<12x128xf32>, vector<32x128xf32>, vector<12x128xf32> -> vector<56x128xf32>
    %cst = arith.constant 0.000000e+00 : f32
    %17 = vector.broadcast %cst : f32 to vector<32x128xf32>
    %18 = vector.extract_strided_slice %16 {offsets = [0, 0], sizes = [32, 128], strides = [1, 1]} : vector<56x128xf32> to vector<32x128xf32>
    %19 = arith.addf %17, %18 : vector<32x128xf32>
    %20 = vector.extract_strided_slice %16 {offsets = [1, 0], sizes = [32, 128], strides = [1, 1]} : vector<56x128xf32> to vector<32x128xf32>
    %21 = arith.addf %19, %20 : vector<32x128xf32>
    %22 = vector.extract_strided_slice %16 {offsets = [2, 0], sizes = [32, 128], strides = [1, 1]} : vector<56x128xf32> to vector<32x128xf32>
    %23 = arith.addf %21, %22 : vector<32x128xf32>
    %24 = vector.extract_strided_slice %16 {offsets = [3, 0], sizes = [32, 128], strides = [1, 1]} : vector<56x128xf32> to vector<32x128xf32>
    %25 = arith.addf %23, %24 : vector<32x128xf32>
    %26 = vector.extract_strided_slice %16 {offsets = [4, 0], sizes = [32, 128], strides = [1, 1]} : vector<56x128xf32> to vector<32x128xf32>
    %27 = arith.addf %25, %26 : vector<32x128xf32>
    %28 = vector.extract_strided_slice %16 {offsets = [5, 0], sizes = [32, 128], strides = [1, 1]} : vector<56x128xf32> to vector<32x128xf32>
    %29 = arith.addf %27, %28 : vector<32x128xf32>
    %30 = vector.extract_strided_slice %16 {offsets = [6, 0], sizes = [32, 128], strides = [1, 1]} : vector<56x128xf32> to vector<32x128xf32>
    %31 = arith.addf %29, %30 : vector<32x128xf32>
    %32 = vector.extract_strided_slice %16 {offsets = [7, 0], sizes = [32, 128], strides = [1, 1]} : vector<56x128xf32> to vector<32x128xf32>
    %33 = arith.addf %31, %32 : vector<32x128xf32>
    %34 = vector.extract_strided_slice %16 {offsets = [8, 0], sizes = [32, 128], strides = [1, 1]} : vector<56x128xf32> to vector<32x128xf32>
    %35 = arith.addf %33, %34 : vector<32x128xf32>
    %36 = vector.extract_strided_slice %16 {offsets = [9, 0], sizes = [32, 128], strides = [1, 1]} : vector<56x128xf32> to vector<32x128xf32>
    %37 = arith.addf %35, %36 : vector<32x128xf32>
    %38 = vector.extract_strided_slice %16 {offsets = [10, 0], sizes = [32, 128], strides = [1, 1]} : vector<56x128xf32> to vector<32x128xf32>
    %39 = arith.addf %37, %38 : vector<32x128xf32>
    %40 = vector.extract_strided_slice %16 {offsets = [11, 0], sizes = [32, 128], strides = [1, 1]} : vector<56x128xf32> to vector<32x128xf32>
    %41 = arith.addf %39, %40 : vector<32x128xf32>
    %42 = vector.extract_strided_slice %16 {offsets = [12, 0], sizes = [32, 128], strides = [1, 1]} : vector<56x128xf32> to vector<32x128xf32>
    %43 = arith.addf %41, %42 : vector<32x128xf32>
    %44 = vector.extract_strided_slice %16 {offsets = [13, 0], sizes = [32, 128], strides = [1, 1]} : vector<56x128xf32> to vector<32x128xf32>
    %45 = arith.addf %43, %44 : vector<32x128xf32>
    %46 = vector.extract_strided_slice %16 {offsets = [14, 0], sizes = [32, 128], strides = [1, 1]} : vector<56x128xf32> to vector<32x128xf32>
    %47 = arith.addf %45, %46 : vector<32x128xf32>
    %48 = vector.extract_strided_slice %16 {offsets = [15, 0], sizes = [32, 128], strides = [1, 1]} : vector<56x128xf32> to vector<32x128xf32>
    %49 = arith.addf %47, %48 : vector<32x128xf32>
    %50 = vector.extract_strided_slice %16 {offsets = [16, 0], sizes = [32, 128], strides = [1, 1]} : vector<56x128xf32> to vector<32x128xf32>
    %51 = arith.addf %49, %50 : vector<32x128xf32>
    %52 = vector.extract_strided_slice %16 {offsets = [17, 0], sizes = [32, 128], strides = [1, 1]} : vector<56x128xf32> to vector<32x128xf32>
    %53 = arith.addf %51, %52 : vector<32x128xf32>
    %54 = vector.extract_strided_slice %16 {offsets = [18, 0], sizes = [32, 128], strides = [1, 1]} : vector<56x128xf32> to vector<32x128xf32>
    %55 = arith.addf %53, %54 : vector<32x128xf32>
    %56 = vector.extract_strided_slice %16 {offsets = [19, 0], sizes = [32, 128], strides = [1, 1]} : vector<56x128xf32> to vector<32x128xf32>
    %57 = arith.addf %55, %56 : vector<32x128xf32>
    %58 = vector.extract_strided_slice %16 {offsets = [20, 0], sizes = [32, 128], strides = [1, 1]} : vector<56x128xf32> to vector<32x128xf32>
    %59 = arith.addf %57, %58 : vector<32x128xf32>
    %60 = vector.extract_strided_slice %16 {offsets = [21, 0], sizes = [32, 128], strides = [1, 1]} : vector<56x128xf32> to vector<32x128xf32>
    %61 = arith.addf %59, %60 : vector<32x128xf32>
    %62 = vector.extract_strided_slice %16 {offsets = [22, 0], sizes = [32, 128], strides = [1, 1]} : vector<56x128xf32> to vector<32x128xf32>
    %63 = arith.addf %61, %62 : vector<32x128xf32>
    %64 = vector.extract_strided_slice %16 {offsets = [23, 0], sizes = [32, 128], strides = [1, 1]} : vector<56x128xf32> to vector<32x128xf32>
    %65 = arith.addf %63, %64 : vector<32x128xf32>
    %66 = vector.extract_strided_slice %16 {offsets = [24, 0], sizes = [32, 128], strides = [1, 1]} : vector<56x128xf32> to vector<32x128xf32>
    %67 = arith.addf %65, %66 : vector<32x128xf32>
    %cst_7 = arith.constant 4.000000e-02 : f32
    %68 = vector.broadcast %cst_7 : f32 to vector<32x128xf32>
    %69 = arith.mulf %67, %68 : vector<32x128xf32>
    %c0_8 = arith.constant 0 : index
    %c0_9 = arith.constant 0 : index
    %c0_10 = arith.constant 0 : index
    %70 = vector.load %arg5[%c0_8, %c0_9, %c0_10] : memref<1x32x128xf32, #tpu.memory_space<vmem>>, vector<1x32x128xf32>
    %71 = vector.shape_cast %70 : vector<1x32x128xf32> to vector<32x128xf32>
    %72 = vector.shape_cast %69 : vector<32x128xf32> to vector<1x32x128xf32>
    tpu.vector_store %arg5[%c0_8, %c0_9, %c0_10], %72 {strides = array<i32>} : memref<1x32x128xf32, #tpu.memory_space<vmem>>, vector<1x32x128xf32>,
    return
  }
  func.func @transform_0(%arg0: i32, %arg1: i32) -> (i32, i32, i32) {
    %c2_i32 = arith.constant 2 : i32
    %0 = arith.muli %arg1, %c2_i32 : i32
    %c1_i32 = arith.constant 1 : i32
    %1 = arith.subi %0, %c1_i32 : i32
    %c0_i32 = arith.constant 0 : i32
    %2 = arith.maxsi %1, %c0_i32 : i32
    %c0_i32_0 = arith.constant 0 : i32
    %c0_i32_1 = arith.constant 0 : i32
    return %arg0, %2, %c0_i32_0 : i32, i32, i32
  }
  func.func @transform_1(%arg0: i32, %arg1: i32) -> (i32, i32, i32) {
    %c0_i32 = arith.constant 0 : i32
    %c0_i32_0 = arith.constant 0 : i32
    return %arg0, %arg1, %c0_i32 : i32, i32, i32
  }
  func.func @transform_2(%arg0: i32, %arg1: i32) -> (i32, i32, i32) {
    %c1_i32 = arith.constant 1 : i32
    %0 = arith.addi %arg1, %c1_i32 : i32
    %c2_i32 = arith.constant 2 : i32
    %1 = arith.muli %0, %c2_i32 : i32
    %c5_i32 = arith.constant 5 : i32
    %2 = arith.minsi %1, %c5_i32 : i32
    %c0_i32 = arith.constant 0 : i32
    %c0_i32_0 = arith.constant 0 : i32
    return %arg0, %2, %c0_i32 : i32, i32, i32
  }
  func.func @transform_3(%arg0: i32, %arg1: i32) -> (i32, i32, i32) {
    %c0_i32 = arith.constant 0 : i32
    %c0_i32_0 = arith.constant 0 : i32
    return %arg0, %arg1, %c0_i32 : i32, i32, i32
  }
}

</mosaic_0001>

<llo_original>
// kernel: tpu_custom_call.1
$region0: #{tpu_custom_call.1}
  #allocation0 [shape = 'u32[]', space=smem, size = 0x4, offset = 0x4, fixed_abs, tag = 'smem constant byte address 0x4 - core index']
  #allocation1 [shape = 'u32[144,128]{1,0:T(1,128)}', space=vmem, size = 0x12000, scoped, tag = 'internal scratch']
  %s0 = inlined_call_operand.hbm [shape: f32[2,96,128], index: 0, kind: input, shape index: {}]
  %s1 = inlined_call_operand.hbm [shape: f32[2,96,128], index: 1, kind: input, shape index: {}]
  %s2 = inlined_call_operand.hbm [shape: f32[2,96,128], index: 2, kind: input, shape index: {}]
  %s3 = inlined_call_operand.hbm [shape: f32[2,96,128], index: 3, kind: output, shape index: {}]
  %s4 = sld [smem:[#allocation0]]
  $region57: #{tpu_custom_call.1} parent=0
    _
  %s6 = ssub.s32 1, %s4
  %s7 = scalar_select 0, %s6, %s4
  $region1: #{tpu_custom_call.1} parent=0
    #allocation2 [shape = 'u8[16384]{0}', space=vmem, size = 0x4000, scoped, tag = 'input window, operand 0']
    #allocation3 [shape = 's32[2]{0}', space=sflag, size = 0x8, scoped, tag = 'scoped memory for tpu_custom_call.1']
    #allocation4 [shape = 's32[2]{0}', space=sflag, size = 0x8, scoped, tag = 'scoped memory for tpu_custom_call.1']
    #allocation5 [shape = 'u8[32768]{0}', space=vmem, size = 0x8000, scoped, tag = 'input window, operand 1']
    #allocation6 [shape = 's32[2]{0}', space=sflag, size = 0x8, scoped, tag = 'scoped memory for tpu_custom_call.1']
    #allocation7 [shape = 'u8[16384]{0}', space=vmem, size = 0x4000, scoped, tag = 'input window, operand 2']
    #allocation8 [shape = 'u8[32768]{0}', space=vmem, size = 0x8000, scoped, tag = 'output window, operand 0']
    %8 = vsyncpa [#allocation3], 0
    %s9 = scalar_lea.sflag [#allocation3], 1
    %10 = vsyncpa %s9, 0
    %11 = vsyncpa [#allocation6], 0
    %s12 = scalar_lea.sflag [#allocation6], 1
    %13 = vsyncpa %s12, 0
    %14 = vsyncpa [#allocation4], 0
    %s15 = scalar_lea.sflag [#allocation4], 1
    %16 = vsyncpa %s15, 0
    loop: start=0, step=1, limit=8
    $region2: #{tpu_custom_call.1} parent=1 // loop_pre_header
      _
    $region3: #{tpu_custom_call.1} parent=1 // loop_header
      %s18 = sphi 0, %s22
      %p19 = scmp.ge.s32.totalorder %s18, 8
      %s25 = sphi 0, %s37
      %s26 = sphi 0, %s33
      %s27 = sphi 0, %s25
      %s28 = sphi 0, %s26
      %s29 = sphi 0, %s27
      %s30 = sphi 0, %s28
      %s50 = sphi 0, %s52
      %s53 = sphi 0, %s50
      %s54 = sphi 0, %s53
      %s70 = sphi 0, %s54
      %s78 = sphi 0, %s80
      %s81 = sphi 0, %s78
      %s82 = sphi 0, %s81
      %s98 = sphi 0, %s82
      %s114 = sphi 0, %s116
      %s117 = sphi 0, %s114
      %s118 = sphi 0, %s117
      %s134 = sphi 0, %s118
      %s142 = sphi 0, %s144
      %s145 = sphi 0, %s142
      %s146 = sphi 0, %s145
      %s162 = sphi 0, %s146
    $region4: #{tpu_custom_call.1} parent=1 // loop_header_branch
      %21 = sbr.rel (%p19) target = $region8
    $region5: #{tpu_custom_call.1} parent=1 // loop_body
      %s23 = ssub.s32 %s18, 1
      %s24 = ssub.s32 %s18, 2
      %s31 = sadd.s32 1, %s26
      %p32 = scmp.ge.s32.totalorder %s31, 3
      %s33 = scalar_select %p32, 0, %s31
      %s34 = sadd.s32 1, %s25
      %s35 = scalar_select %p32, %s34, %s25
      %p36 = scmp.ge.s32.totalorder %s35, 2
      %s37 = scalar_select %p36, 0, %s35
      %s38 = smul.u32 %s26, 2
      %s39 = ssub.s32 %s38, 1
      %p40 = scmp.gt.s32.totalorder %s39, 0
      %s41 = scalar_select %p40, %s39, 0
      %s42 = smul.u32 %s33, 2
      %s43 = ssub.s32 %s42, 1
      %p44 = scmp.gt.s32.totalorder %s43, 0
      %s45 = scalar_select %p44, %s43, 0
      %s46 = ssub.s32 %s25, %s37
      %s47 = ssub.s32 %s41, %s45
      %s48 = sor.u32 %s46, %s47
      %p49 = scmp.eq.s32.totalorder %s48, 0
      %s51 = sadd.s32 %s50, 1
      %s52 = scalar_select %p49, %s50, %s51
      %p55 = pneg %p49
      %p56 = scmp.eq.s32.totalorder %s18, 5
      %p57 = por %p55, %p56
      %p58 = scmp.ne.s32.totalorder %s50, %s53
      %p59 = scmp.eq.s32.totalorder %s18, 0
      %p60 = por %p58, %p59
      %p61 = scmp.ne.s32.totalorder %s50, %s53
      %p62 = scmp.eq.s32.totalorder %s23, 5
      %p63 = por %p61, %p62
      %p64 = scmp.ne.s32.totalorder %s53, %s54
      %p65 = scmp.eq.s32.totalorder %s23, 0
      %p66 = por %p64, %p65
      %p67 = scmp.ne.s32.totalorder %s53, %s54
      %p68 = scmp.eq.s32.totalorder %s24, 5
      %p69 = por %p67, %p68
      %p71 = scmp.ne.s32.totalorder %s54, %s70
      %p72 = scmp.eq.s32.totalorder %s24, 0
      %p73 = por %p71, %p72
      %s74 = ssub.s32 %s25, %s37
      %s75 = ssub.s32 %s26, %s33
      %s76 = sor.u32 %s74, %s75
      %p77 = scmp.eq.s32.totalorder %s76, 0
      %s79 = sadd.s32 %s78, 1
      %s80 = scalar_select %p77, %s78, %s79
      %p83 = pneg %p77
      %p84 = scmp.eq.s32.totalorder %s18, 5
      %p85 = por %p83, %p84
      %p86 = scmp.ne.s32.totalorder %s78, %s81
      %p87 = scmp.eq.s32.totalorder %s18, 0
      %p88 = por %p86, %p87
      %p89 = scmp.ne.s32.totalorder %s78, %s81
      %p90 = scmp.eq.s32.totalorder %s23, 5
      %p91 = por %p89, %p90
      %p92 = scmp.ne.s32.totalorder %s81, %s82
      %p93 = scmp.eq.s32.totalorder %s23, 0
      %p94 = por %p92, %p93
      %p95 = scmp.ne.s32.totalorder %s81, %s82
      %p96 = scmp.eq.s32.totalorder %s24, 5
      %p97 = por %p95, %p96
      %p99 = scmp.ne.s32.totalorder %s82, %s98
      %p100 = scmp.eq.s32.totalorder %s24, 0
      %p101 = por %p99, %p100
      %s102 = sadd.s32 %s26, 1
      %s103 = smul.u32 %s102, 2
      %p104 = scmp.lt.s32.totalorder %s103, 5
      %s105 = scalar_select %p104, %s103, 5
      %s106 = sadd.s32 %s33, 1
      %s107 = smul.u32 %s106, 2
      %p108 = scmp.lt.s32.totalorder %s107, 5
      %s109 = scalar_select %p108, %s107, 5
      %s110 = ssub.s32 %s25, %s37
      %s111 = ssub.s32 %s105, %s109
      %s112 = sor.u32 %s110, %s111
      %p113 = scmp.eq.s32.totalorder %s112, 0
      %s115 = sadd.s32 %s114, 1
      %s116 = scalar_select %p113, %s114, %s115
      %p119 = pneg %p113
      %p120 = scmp.eq.s32.totalorder %s18, 5
      %p121 = por %p119, %p120
      %p122 = scmp.ne.s32.totalorder %s114, %s117
      %p123 = scmp.eq.s32.totalorder %s18, 0
      %p124 = por %p122, %p123
      %p125 = scmp.ne.s32.totalorder %s114, %s117
      %p126 = scmp.eq.s32.totalorder %s23, 5
      %p127 = por %p125, %p126
      %p128 = scmp.ne.s32.totalorder %s117, %s118
      %p129 = scmp.eq.s32.totalorder %s23, 0
      %p130 = por %p128, %p129
      %p131 = scmp.ne.s32.totalorder %s117, %s118
      %p132 = scmp.eq.s32.totalorder %s24, 5
      %p133 = por %p131, %p132
      %p135 = scmp.ne.s32.totalorder %s118, %s134
      %p136 = scmp.eq.s32.totalorder %s24, 0
      %p137 = por %p135, %p136
      %s138 = ssub.s32 %s25, %s37
      %s139 = ssub.s32 %s26, %s33
      %s140 = sor.u32 %s138, %s139
      %p141 = scmp.eq.s32.totalorder %s140, 0
      %s143 = sadd.s32 %s142, 1
      %s144 = scalar_select %p141, %s142, %s143
      %p147 = pneg %p141
      %p148 = scmp.eq.s32.totalorder %s18, 5
      %p149 = por %p147, %p148
      %p150 = scmp.ne.s32.totalorder %s142, %s145
      %p151 = scmp.eq.s32.totalorder %s18, 0
      %p152 = por %p150, %p151
      %p153 = scmp.ne.s32.totalorder %s142, %s145
      %p154 = scmp.eq.s32.totalorder %s23, 5
      %p155 = por %p153, %p154
      %p156 = scmp.ne.s32.totalorder %s145, %s146
      %p157 = scmp.eq.s32.totalorder %s23, 0
      %p158 = por %p156, %p157
      %p159 = scmp.ne.s32.totalorder %s145, %s146
      %p160 = scmp.eq.s32.totalorder %s24, 5
      %p161 = por %p159, %p160
      %p163 = scmp.ne.s32.totalorder %s146, %s162
      %p164 = scmp.eq.s32.totalorder %s24, 0
      %p165 = por %p163, %p164
      %p166 = scmp.le.s32.totalorder 1, %s18
      %p167 = scmp.lt.s32.totalorder %s18, 7
      %p168 = pnand %p166, %p167
      %p169 = pneg %p168
      // Predicated region
      $region9: #{tpu_custom_call.1} parent=5 // pred_check
        _
      $region10: #{tpu_custom_call.1} parent=5 // pred_check_branch
        %171 = sbr.rel (%p168) target = $region12
      $region11: #{tpu_custom_call.1} parent=5 // pred_region
        %s172 = ssub.s32 %s18, 1
      $region12: #{tpu_custom_call.1} parent=5 // pred_fallthru
        _
      %p173 = scmp.lt.s32.totalorder %s18, 6
      // Predicated region
      $region13: #{tpu_custom_call.1} parent=5 // pred_check
        %p174 = pneg %p173
      $region14: #{tpu_custom_call.1} parent=5 // pred_check_branch
        %176 = sbr.rel (%p174) target = $region16
      $region15: #{tpu_custom_call.1} parent=5 // pred_region
        // Predicated region
        $region17: #{tpu_custom_call.1} parent=15 // pred_check
          %p177 = pneg %p60
        $region18: #{tpu_custom_call.1} parent=15 // pred_check_branch
          %179 = sbr.rel (%p177) target = $region20
        $region19: #{tpu_custom_call.1} parent=15 // pred_region
          %s180 = sand.u32 %s50, 1
          %s181 = scalar_lea.sflag [#allocation3], %s180
          %s182 = sand.u32 %s50, 1
          %s183 = smul.addr %s182, 16
          %s184 = scalar_lea.vmem [#allocation2], %s183
          %s185 = smul.u32 %s26, 2
          %s186 = ssub.s32 %s185, 1
          %p187 = scmp.gt.s32.totalorder %s186, 0
          %s188 = scalar_select %p187, %s186, 0
          %s189 = smul.u32 2, %s188
          %s191 = ssub.s32 256, 256
          %192 = vsyncadd %s181, %s191
          %s193 = smul.addr %s25, 12
          %s194 = sadd.s32 %s189, %s193
          %s195 = smul.addr %s194, 128
          %s196 = scalar_lea.hbm %s0, %s195
          %s197 = sshll.u32 %s184, 4
          %s198 = int_to_ptr.vmem [resolvable:$true] %s197
          %203 = dma.hbm_to_vmem [thread:$0]  %s196, 256, %s198, %s181, 128, 128, 8
        $region20: #{tpu_custom_call.1} parent=15 // pred_fallthru
          _
        // Predicated region
        $region21: #{tpu_custom_call.1} parent=15 // pred_check
          %p204 = pneg %p88
        $region22: #{tpu_custom_call.1} parent=15 // pred_check_branch
          %206 = sbr.rel (%p204) target = $region24
        $region23: #{tpu_custom_call.1} parent=15 // pred_region
          %s207 = sand.u32 %s18, 1
          %s208 = scalar_lea.sflag [#allocation6], %s207
          %s209 = sand.u32 %s78, 1
          %s210 = smul.addr %s209, 32
          %s211 = scalar_lea.vmem [#allocation5], %s210
          %s212 = smul.u32 4, %s26
          %s214 = ssub.s32 512, 512
          %215 = vsyncadd %s208, %s214
          %s216 = smul.addr %s25, 12
          %s217 = sadd.s32 %s212, %s216
          %s218 = smul.addr %s217, 128
          %s219 = scalar_lea.hbm %s1, %s218
          %s220 = sshll.u32 %s211, 4
          %s221 = int_to_ptr.vmem [resolvable:$true] %s220
          %226 = dma.hbm_to_vmem [thread:$0]  %s219, 512, %s221, %s208, 128, 128, 8
        $region24: #{tpu_custom_call.1} parent=15 // pred_fallthru
          _
        // Predicated region
        $region25: #{tpu_custom_call.1} parent=15 // pred_check
          %p227 = pneg %p124
        $region26: #{tpu_custom_call.1} parent=15 // pred_check_branch
          %229 = sbr.rel (%p227) target = $region28
        $region27: #{tpu_custom_call.1} parent=15 // pred_region
          %s230 = sand.u32 %s18, 1
          %s231 = scalar_lea.sflag [#allocation6], %s230
          %s232 = sand.u32 %s114, 1
          %s233 = smul.addr %s232, 16
          %s234 = scalar_lea.vmem [#allocation7], %s233
          %s235 = sadd.s32 %s26, 1
          %s236 = smul.u32 %s235, 2
          %p237 = scmp.lt.s32.totalorder %s236, 5
          %s238 = scalar_select %p237, %s236, 5
          %s239 = smul.u32 2, %s238
          %s241 = ssub.s32 256, 256
          %242 = vsyncadd %s231, %s241
          %s243 = smul.addr %s25, 12
          %s244 = sadd.s32 %s239, %s243
          %s245 = smul.addr %s244, 128
          %s246 = scalar_lea.hbm %s2, %s245
          %s247 = sshll.u32 %s234, 4
          %s248 = int_to_ptr.vmem [resolvable:$true] %s247
          %253 = dma.hbm_to_vmem [thread:$0]  %s246, 256, %s248, %s231, 128, 128, 8
        $region28: #{tpu_custom_call.1} parent=15 // pred_fallthru
          _
      $region16: #{tpu_custom_call.1} parent=5 // pred_fallthru
        _
      %p254 = scmp.le.s32.totalorder 1, %s18
      %p255 = scmp.lt.s32.totalorder %s18, 7
      %p256 = pnand %p254, %p255
      %p257 = pneg %p256
      // Predicated region
      $region29: #{tpu_custom_call.1} parent=5 // pred_check
        _
      $region30: #{tpu_custom_call.1} parent=5 // pred_check_branch
        %259 = sbr.rel (%p256) target = $region32
      $region31: #{tpu_custom_call.1} parent=5 // pred_region
        %s260 = ssub.s32 %s18, 1
        %s261 = sand.u32 %s53, 1
        %s262 = scalar_lea.sflag [#allocation3], %s261
        %s263 = sand.u32 %s53, 1
        %s264 = smul.addr %s263, 16
        %s265 = scalar_lea.vmem [#allocation2], %s264
        // Predicated region
        $region33: #{tpu_custom_call.1} parent=31 // pred_check
          %p266 = pneg %p66
        $region34: #{tpu_custom_call.1} parent=31 // pred_check_branch
          %268 = sbr.rel (%p266) target = $region36
        $region35: #{tpu_custom_call.1} parent=31 // pred_region
          %269 = dma.done %s262, 256
        $region36: #{tpu_custom_call.1} parent=31 // pred_fallthru
          _
        %s270 = sand.u32 %s23, 1
        %s271 = scalar_lea.sflag [#allocation6], %s270
        %s272 = sand.u32 %s81, 1
        %s273 = smul.addr %s272, 32
        %s274 = scalar_lea.vmem [#allocation5], %s273
        // Predicated region
        $region37: #{tpu_custom_call.1} parent=31 // pred_check
          %p275 = pneg %p94
        $region38: #{tpu_custom_call.1} parent=31 // pred_check_branch
          %277 = sbr.rel (%p275) target = $region40
        $region39: #{tpu_custom_call.1} parent=31 // pred_region
          %278 = dma.done %s271, 512
        $region40: #{tpu_custom_call.1} parent=31 // pred_fallthru
          _
        %s279 = sand.u32 %s23, 1
        %s280 = scalar_lea.sflag [#allocation6], %s279
        %s281 = sand.u32 %s117, 1
        %s282 = smul.addr %s281, 16
        %s283 = scalar_lea.vmem [#allocation7], %s282
        // Predicated region
        $region41: #{tpu_custom_call.1} parent=31 // pred_check
          %p284 = pneg %p130
        $region42: #{tpu_custom_call.1} parent=31 // pred_check_branch
          %286 = sbr.rel (%p284) target = $region44
        $region43: #{tpu_custom_call.1} parent=31 // pred_region
          %287 = dma.done %s280, 256
        $region44: #{tpu_custom_call.1} parent=31 // pred_fallthru
          _
        %s288 = sand.u32 %s53, 1
        %s289 = scalar_lea.sflag [#allocation3], %s288
        %s290 = sand.u32 %s53, 1
        %s291 = smul.addr %s290, 16
        %s292 = scalar_lea.vmem [#allocation2], %s291
        %p293 = pneg %p66
        %p294 = pneg %p63
        %s295 = sand.u32 %s23, 1
        %s296 = scalar_lea.sflag [#allocation6], %s295
        %s297 = sand.u32 %s81, 1
        %s298 = smul.addr %s297, 32
        %s299 = scalar_lea.vmem [#allocation5], %s298
        %p300 = pneg %p94
        %p301 = pneg %p91
        %s302 = sand.u32 %s23, 1
        %s303 = scalar_lea.sflag [#allocation6], %s302
        %s304 = sand.u32 %s117, 1
        %s305 = smul.addr %s304, 16
        %s306 = scalar_lea.vmem [#allocation7], %s305
        %p307 = pneg %p130
        %p308 = pneg %p127
        %p309 = pneg %p158
        %p310 = pneg %p155
        %s311 = sand.u32 %s145, 1
        %s312 = scalar_lea.sflag [#allocation4], %s311
        %s313 = sand.u32 %s145, 1
        %s314 = smul.addr %s313, 32
        %s315 = scalar_lea.vmem [#allocation8], %s314
        %s316 = smul.u32 %s28, 2
        %s317 = ssub.s32 %s316, 1
        %p318 = scmp.gt.s32.totalorder %s317, 0
        %s319 = scalar_select %p318, %s317, 0
        %s320 = smul.u32 2, %s319
        %s321 = smul.u32 4, %s28
        %s322 = sadd.s32 %s28, 1
        %s323 = smul.u32 %s322, 2
        %p324 = scmp.lt.s32.totalorder %s323, 5
        %s325 = scalar_select %p324, %s323, 5
        %s326 = smul.u32 2, %s325
        %s327 = smul.u32 4, %s28
        %v328 = vld [vmem:[%s274] sm:$0xff]
        %v329 = vld [vmem:[%s274 + $0x8] sm:$0xff]
        %v330 = vld [vmem:[%s274 + $0x10] sm:$0xff]
        %v331 = vld [vmem:[%s274 + $0x18] sm:$0xff]
        %v332 = vlaneseq
        %v333 = vshrl.u32 %v332, 7
        %v334 = vsub.s32 0, %v333
        %v335 = vrot.slane %v328, %v334
        %v336 = vlaneseq
        %v337 = vshrl.u32 %v336, 7
        %v338 = vsub.s32 7, %v337
        %v339 = vrot.slane %v331, %v338
        %v340 = vld [vmem:[%s265 + $0x4] sm:$0xff]
        %v341 = vld [vmem:[%s265 + $0xc] sm:$0xf]
        %v342 = vld [vmem:[%s283] sm:$0xff]
        %v343 = vld [vmem:[%s283 + $0x8] sm:$0xf]
        %p344 = scmp.eq.s32.totalorder %s28, 0
        %s345 = scalar_select %p344, 1, 0
        %v346 = vstv %s345
        %vm347 = vcmp.eq.s32.totalorder %v346, 1
        %v348 = vsel %vm347, %v335, %v340
        %v349 = vsel %vm347, %v335, %v341
        %p350 = scmp.eq.s32.totalorder %s28, 2
        %s351 = scalar_select %p350, 1, 0
        %v352 = vstv %s351
        %vm353 = vcmp.eq.s32.totalorder %v352, 1
        %v354 = vsel %vm353, %v339, %v342
        %v355 = vsel %vm353, %v339, %v343
        %vm360 = vcmask 1043456
        %v361 = vrot.slane %v328, 4
        %v362 = vrot.slane %v329, 4
        %v363 = vsel %vm360, %v361, %v362
        %v364 = vrot.slane %v330, 4
        %v365 = vsel %vm360, %v362, %v364
        %v366 = vrot.slane %v331, 4
        %v367 = vsel %vm360, %v364, %v366
        %v375 = vrot.slane %v354, 4
        %v376 = vrot.slane %v355, 4
        %v377 = vsel %vm360, %v375, %v376
        %v380 = vsel %vm360, %v349, %v361
        %v381 = vsel %vm360, %v366, %v375
        %v382 = vadd.f32 %v348, 0.0
        %v383 = vadd.f32 %v380, 0.0
        %v384 = vadd.f32 %v363, 0.0
        %v385 = vadd.f32 %v365, 0.0
        %vm388 = vcmask 1046528
        %v389 = vrot.slane %v348, 1
        %v390 = vrot.slane %v380, 1
        %v391 = vsel %vm388, %v389, %v390
        %v392 = vrot.slane %v363, 1
        %v393 = vsel %vm388, %v390, %v392
        %v394 = vrot.slane %v365, 1
        %v395 = vsel %vm388, %v392, %v394
        %v396 = vrot.slane %v367, 1
        %v397 = vsel %vm388, %v394, %v396
        %v402 = vadd.f32 %v382, %v391
        %v403 = vadd.f32 %v383, %v393
        %v404 = vadd.f32 %v384, %v395
        %v405 = vadd.f32 %v385, %v397
        %vm406 = vcmask 1045504
        %v407 = vrot.slane %v348, 2
        %v408 = vrot.slane %v380, 2
        %v409 = vsel %vm406, %v407, %v408
        %v410 = vrot.slane %v363, 2
        %v411 = vsel %vm406, %v408, %v410
        %v412 = vrot.slane %v365, 2
        %v413 = vsel %vm406, %v410, %v412
        %v414 = vrot.slane %v367, 2
        %v415 = vsel %vm406, %v412, %v414
        %v420 = vadd.f32 %v402, %v409
        %v421 = vadd.f32 %v403, %v411
        %v422 = vadd.f32 %v404, %v413
        %v423 = vadd.f32 %v405, %v415
        %vm424 = vcmask 1044480
        %v425 = vrot.slane %v348, 3
        %v426 = vrot.slane %v380, 3
        %v427 = vsel %vm424, %v425, %v426
        %v428 = vrot.slane %v363, 3
        %v429 = vsel %vm424, %v426, %v428
        %v430 = vrot.slane %v365, 3
        %v431 = vsel %vm424, %v428, %v430
        %v432 = vrot.slane %v367, 3
        %v433 = vsel %vm424, %v430, %v432
        %v438 = vadd.f32 %v420, %v427
        %v439 = vadd.f32 %v421, %v429
        %v440 = vadd.f32 %v422, %v431
        %v441 = vadd.f32 %v423, %v433
        %v442 = vrot.slane %v348, 4
        %v443 = vrot.slane %v380, 4
        %v444 = vsel %vm360, %v442, %v443
        %v445 = vrot.slane %v363, 4
        %v446 = vsel %vm360, %v443, %v445
        %v447 = vrot.slane %v365, 4
        %v448 = vsel %vm360, %v445, %v447
        %v449 = vrot.slane %v367, 4
        %v450 = vsel %vm360, %v447, %v449
        %v455 = vadd.f32 %v438, %v444
        %v456 = vadd.f32 %v439, %v446
        %v457 = vadd.f32 %v440, %v448
        %v458 = vadd.f32 %v441, %v450
        %vm459 = vcmask 1042432
        %v460 = vrot.slane %v348, 5
        %v461 = vrot.slane %v380, 5
        %v462 = vsel %vm459, %v460, %v461
        %v463 = vrot.slane %v363, 5
        %v464 = vsel %vm459, %v461, %v463
        %v465 = vrot.slane %v365, 5
        %v466 = vsel %vm459, %v463, %v465
        %v467 = vrot.slane %v367, 5
        %v468 = vsel %vm459, %v465, %v467
        %v473 = vadd.f32 %v455, %v462
        %v474 = vadd.f32 %v456, %v464
        %v475 = vadd.f32 %v457, %v466
        %v476 = vadd.f32 %v458, %v468
        %vm477 = vcmask 1041408
        %v478 = vrot.slane %v348, 6
        %v479 = vrot.slane %v380, 6
        %v480 = vsel %vm477, %v478, %v479
        %v481 = vrot.slane %v363, 6
        %v482 = vsel %vm477, %v479, %v481
        %v483 = vrot.slane %v365, 6
        %v484 = vsel %vm477, %v481, %v483
        %v485 = vrot.slane %v367, 6
        %v486 = vsel %vm477, %v483, %v485
        %v491 = vadd.f32 %v473, %v480
        %v492 = vadd.f32 %v474, %v482
        %v493 = vadd.f32 %v475, %v484
        %v494 = vadd.f32 %v476, %v486
        %vm495 = vcmask 1040384
        %v496 = vrot.slane %v348, 7
        %v497 = vrot.slane %v380, 7
        %v498 = vsel %vm495, %v496, %v497
        %v499 = vrot.slane %v363, 7
        %v500 = vsel %vm495, %v497, %v499
        %v501 = vrot.slane %v365, 7
        %v502 = vsel %vm495, %v499, %v501
        %v503 = vrot.slane %v367, 7
        %v504 = vsel %vm495, %v501, %v503
        %v509 = vadd.f32 %v491, %v498
        %v510 = vadd.f32 %v492, %v500
        %v511 = vadd.f32 %v493, %v502
        %v512 = vadd.f32 %v494, %v504
        %v513 = vadd.f32 %v509, %v380
        %v514 = vadd.f32 %v510, %v363
        %v515 = vadd.f32 %v511, %v365
        %v516 = vadd.f32 %v512, %v367
        %v518 = vrot.slane %v381, 1
        %v519 = vsel %vm388, %v396, %v518
        %v521 = vadd.f32 %v513, %v393
        %v522 = vadd.f32 %v514, %v395
        %v523 = vadd.f32 %v515, %v397
        %v524 = vadd.f32 %v516, %v519
        %v525 = vrot.slane %v381, 2
        %v526 = vsel %vm406, %v414, %v525
        %v528 = vadd.f32 %v521, %v411
        %v529 = vadd.f32 %v522, %v413
        %v530 = vadd.f32 %v523, %v415
        %v531 = vadd.f32 %v524, %v526
        %v532 = vrot.slane %v381, 3
        %v533 = vsel %vm424, %v432, %v532
        %v535 = vadd.f32 %v528, %v429
        %v536 = vadd.f32 %v529, %v431
        %v537 = vadd.f32 %v530, %v433
        %v538 = vadd.f32 %v531, %v533
        %v539 = vrot.slane %v381, 4
        %v540 = vsel %vm360, %v449, %v539
        %v542 = vadd.f32 %v535, %v446
        %v543 = vadd.f32 %v536, %v448
        %v544 = vadd.f32 %v537, %v450
        %v545 = vadd.f32 %v538, %v540
        %v546 = vrot.slane %v381, 5
        %v547 = vsel %vm459, %v467, %v546
        %v549 = vadd.f32 %v542, %v464
        %v550 = vadd.f32 %v543, %v466
        %v551 = vadd.f32 %v544, %v468
        %v552 = vadd.f32 %v545, %v547
        %v553 = vrot.slane %v381, 6
        %v554 = vsel %vm477, %v485, %v553
        %v556 = vadd.f32 %v549, %v482
        %v557 = vadd.f32 %v550, %v484
        %v558 = vadd.f32 %v551, %v486
        %v559 = vadd.f32 %v552, %v554
        %v560 = vrot.slane %v381, 7
        %v561 = vsel %vm495, %v503, %v560
        %v563 = vadd.f32 %v556, %v500
        %v564 = vadd.f32 %v557, %v502
        %v565 = vadd.f32 %v558, %v504
        %v566 = vadd.f32 %v559, %v561
        %v567 = vadd.f32 %v563, %v363
        %v568 = vadd.f32 %v564, %v365
        %v569 = vadd.f32 %v565, %v367
        %v570 = vadd.f32 %v566, %v381
        %v571 = vrot.slane %v377, 1
        %v572 = vsel %vm388, %v518, %v571
        %v574 = vadd.f32 %v567, %v395
        %v575 = vadd.f32 %v568, %v397
        %v576 = vadd.f32 %v569, %v519
        %v577 = vadd.f32 %v570, %v572
        %v578 = vrot.slane %v377, 2
        %v579 = vsel %vm406, %v525, %v578
        %v581 = vadd.f32 %v574, %v413
        %v582 = vadd.f32 %v575, %v415
        %v583 = vadd.f32 %v576, %v526
        %v584 = vadd.f32 %v577, %v579
        %v585 = vrot.slane %v377, 3
        %v586 = vsel %vm424, %v532, %v585
        %v588 = vadd.f32 %v581, %v431
        %v589 = vadd.f32 %v582, %v433
        %v590 = vadd.f32 %v583, %v533
        %v591 = vadd.f32 %v584, %v586
        %v592 = vrot.slane %v377, 4
        %v593 = vsel %vm360, %v539, %v592
        %v595 = vadd.f32 %v588, %v448
        %v596 = vadd.f32 %v589, %v450
        %v597 = vadd.f32 %v590, %v540
        %v598 = vadd.f32 %v591, %v593
        %v599 = vrot.slane %v377, 5
        %v600 = vsel %vm459, %v546, %v599
        %v602 = vadd.f32 %v595, %v466
        %v603 = vadd.f32 %v596, %v468
        %v604 = vadd.f32 %v597, %v547
        %v605 = vadd.f32 %v598, %v600
        %v606 = vrot.slane %v377, 6
        %v607 = vsel %vm477, %v553, %v606
        %v609 = vadd.f32 %v602, %v484
        %v610 = vadd.f32 %v603, %v486
        %v611 = vadd.f32 %v604, %v554
        %v612 = vadd.f32 %v605, %v607
        %v613 = vrot.slane %v377, 7
        %v614 = vsel %vm495, %v560, %v613
        %v616 = vadd.f32 %v609, %v502
        %v617 = vadd.f32 %v610, %v504
        %v618 = vadd.f32 %v611, %v561
        %v619 = vadd.f32 %v612, %v614
        %v620 = vadd.f32 %v616, %v365
        %v621 = vadd.f32 %v617, %v367
        %v622 = vadd.f32 %v618, %v381
        %v623 = vadd.f32 %v619, %v377
        %v624 = vmul.f32 %v620, 0.04
        %v625 = vmul.f32 %v621, 0.04
        %v626 = vmul.f32 %v622, 0.04
        %v627 = vmul.f32 %v623, 0.04
        %628 = vst [vmem:[%s315] sm:$0xff] %v624
        %629 = vst [vmem:[%s315 + $0x8] sm:$0xff] %v625
        %630 = vst [vmem:[%s315 + $0x10] sm:$0xff] %v626
        %631 = vst [vmem:[%s315 + $0x18] sm:$0xff] %v627
        %s632 = sand.u32 %s145, 1
        %s633 = scalar_lea.sflag [#allocation4], %s632
        %s634 = sand.u32 %s145, 1
        %s635 = smul.addr %s634, 32
        %s636 = scalar_lea.vmem [#allocation8], %s635
        // Predicated region
        $region45: #{tpu_custom_call.1} parent=31 // pred_check
          %p637 = pneg %p155
        $region46: #{tpu_custom_call.1} parent=31 // pred_check_branch
          %639 = sbr.rel (%p637) target = $region48
        $region47: #{tpu_custom_call.1} parent=31 // pred_region
          %s640 = smul.u32 4, %s28
          %s642 = ssub.s32 512, 512
          %643 = vsyncadd %s633, %s642
          %s644 = smul.addr %s27, 12
          %s645 = sadd.s32 %s640, %s644
          %s646 = smul.addr %s645, 128
          %s647 = scalar_lea.hbm %s3, %s646
          %s648 = sshll.u32 %s636, 4
          %s649 = int_to_ptr.vmem [resolvable:$true] %s648
          %654 = dma.vmem_to_hbm [thread:$0]  %s649, 512, %s647, %s633, 128, 128, 8
        $region48: #{tpu_custom_call.1} parent=31 // pred_fallthru
          _
      $region32: #{tpu_custom_call.1} parent=5 // pred_fallthru
        _
      %p655 = scmp.le.s32.totalorder 2, %s18
      // Predicated region
      $region49: #{tpu_custom_call.1} parent=5 // pred_check
        %p656 = pneg %p655
      $region50: #{tpu_custom_call.1} parent=5 // pred_check_branch
        %658 = sbr.rel (%p656) target = $region52
      $region51: #{tpu_custom_call.1} parent=5 // pred_region
        %s659 = ssub.s32 %s18, 2
        // Predicated region
        $region53: #{tpu_custom_call.1} parent=51 // pred_check
          %p660 = pneg %p161
        $region54: #{tpu_custom_call.1} parent=51 // pred_check_branch
          %662 = sbr.rel (%p660) target = $region56
        $region55: #{tpu_custom_call.1} parent=51 // pred_region
          %s663 = sand.u32 %s146, 1
          %s664 = scalar_lea.sflag [#allocation4], %s663
          %s665 = sand.u32 %s146, 1
          %s666 = smul.addr %s665, 32
          %s667 = scalar_lea.vmem [#allocation8], %s666
          %668 = dma.done %s664, 512
        $region56: #{tpu_custom_call.1} parent=51 // pred_fallthru
          _
      $region52: #{tpu_custom_call.1} parent=5 // pred_fallthru
        _
    $region6: #{tpu_custom_call.1} parent=1 // loop_footer
      %s22 = sadd.s32 1, %s18
    $region7: #{tpu_custom_call.1} parent=1 // loop_footer_branch
      %17 = sbr.rel target = $region3
    $region8: #{tpu_custom_call.1} parent=1 // loop_exit
      _
    %669 = vsyncpa [#allocation3], 1
    %s670 = scalar_lea.sflag [#allocation3], 1
    %671 = vsyncpa %s670, 1
    %672 = vsyncpa [#allocation6], 1
    %s673 = scalar_lea.sflag [#allocation6], 1
    %674 = vsyncpa %s673, 1
    %675 = vsyncpa [#allocation4], 1
    %s676 = scalar_lea.sflag [#allocation4], 1
    %677 = vsyncpa %s676, 1

</llo_original>
